<compile_context>
chip_gen: v7x
topology: tpu7x:2x2x1
jax: 0.10.0
libtpu: 0.0.40
codegen_flags: <defaults>
</compile_context>

<pallas_src>
import jax
import jax.numpy as jnp
from jax.experimental import pallas as pl
from jax.experimental.pallas import tpu as pltpu


def _channel_matmul(wt, x, bias_f32=None):
    """(M, K) @ (K, tp) -> f32 (M, tp), optionally + bias (f32, broadcastable).

    For tiny channel counts the MXU would run at <2% utilization and only add
    push/pop FIFO latency per tile, so the contraction is unrolled as VPU
    broadcast-FMAs.  Larger problems use the MXU with f32 accumulation.
    """
    m, k = wt.shape
    if m <= 16 and k <= 32:
        wf = wt.astype(jnp.float32)
        xf = x.astype(jnp.float32)
        acc = wf[:, 0:1] * xf[0:1, :]
        for i in range(1, k):
            acc = acc + wf[:, i:i + 1] * xf[i:i + 1, :]
        if bias_f32 is not None:
            acc = acc + bias_f32
        return acc
    y = jnp.dot(wt, x.astype(wt.dtype), preferred_element_type=jnp.float32)
    return y if bias_f32 is None else y + bias_f32


def _self_attention_kernel(x_ref, w1t_ref, w2t_ref, b2_ref, o_ref):
    # x_ref:   (C_in, tp)   pixel tile (channels on sublanes, pixels on lanes)
    # w1t_ref: (mid, C_in)  v_conv weight, transposed
    # w2t_ref: (G, mid)     x_conv weight, transposed
    # b2_ref:  (G, 1)       x_conv bias (f32 column, broadcasts over pixels)
    # o_ref:   (G, tp)
    h = _channel_matmul(w1t_ref[...], x_ref[...])
    h = jnp.where(h >= 0, h, 0.01 * h)                   # LeakyReLU(0.01)
    y = _channel_matmul(w2t_ref[...], h, bias_f32=b2_ref[...])
    o_ref[...] = y.astype(o_ref.dtype)


def _vmem_budget_bytes():
    try:
        cap = int(pltpu.get_tpu_info().vmem_capacity_bytes)
    except Exception:  # pragma: no cover - conservative (v7x-sized) fallback
        cap = 64 << 20
    # ~40 MiB usable on v7x (64 MiB physical), ~96 MiB on v5e/v6e (128 MiB).
    budget = max(16 << 20, min(3 * cap // 4, cap - (24 << 20)))
    return budget, cap


@jax.jit
def self_attention_forward(v_nchw, w1, w2, b2):
    """v_nchw: (B, C_in, H, W); w1: (C_in, mid); w2: (mid, G); b2: (G,)."""
    B, C_in, H, W = v_nchw.shape
    mid = w1.shape[1]
    G = w2.shape[1]
    P = H * W
    dtype = v_nchw.dtype
    itemsize = jnp.dtype(dtype).itemsize

    # Channels-first view; pure reshape, no transpose / extra HBM copy.
    x = v_nchw.reshape(B, C_in, P)

    # Tiny one-off weight transposes.  Weights follow the activation dtype so a
    # bf16 input gives a bf16 MXU/HBM path; the bias stays f32 for the epilogue.
    w1_t = w1.T.astype(dtype)                      # (mid, C_in)
    w2_t = w2.T.astype(dtype)                      # (G, mid)
    b2_col = b2.reshape(G, 1).astype(jnp.float32)  # (G, 1)

    # ---- size the pixel tile tp from the real VMEM footprint ---------------
    budget, vmem_cap = _vmem_budget_bytes()
    weight_bytes = (C_in * mid + mid * G) * itemsize + G * 4
    # Per pixel column: double-buffered x / out tiles + f32 intermediates
    # (x cast, hidden h, pre-cast y).
    per_col = 2 * (C_in + G) * itemsize + (C_in + mid + G) * 4
    fixed = 2 * weight_bytes + (2 << 20)           # weight buffers + margin
    p128 = pl.cdiv(P, 128) * 128
    tp = max(128, min(p128, ((budget - fixed) // per_col) // 128 * 128))
    n_pt = pl.cdiv(P, tp)

    footprint = tp * per_col + fixed
    vmem_limit = int(min(max(footprint + (2 << 20), 16 << 20),
                         vmem_cap - (16 << 20)))

    cost = pl.CostEstimate(
        flops=2 * B * P * (C_in * mid + mid * G) + B * P * mid,
        transcendentals=0,
        bytes_accessed=B * P * (C_in + G) * itemsize + weight_bytes,
    )

    out = pl.pallas_call(
        _self_attention_kernel,
        out_shape=jax.ShapeDtypeStruct((B, G, P), dtype),
        grid_spec=pltpu.PrefetchScalarGridSpec(
            num_scalar_prefetch=0,
            # Pixel tiles lead (larger / always-present axis) so the v7x
            # megacore split stays balanced even for B == 1.
            grid=(n_pt, B),
            in_specs=[
                pl.BlockSpec((None, C_in, tp), lambda p, b: (b, 0, p)),
                pl.BlockSpec((mid, C_in), lambda p, b: (0, 0)),
                pl.BlockSpec((G, mid), lambda p, b: (0, 0)),
                pl.BlockSpec((G, 1), lambda p, b: (0, 0)),
            ],
            out_specs=pl.BlockSpec((None, G, tp), lambda p, b: (b, 0, p)),
        ),
        compiler_params=pltpu.CompilerParams(
            dimension_semantics=("parallel", "parallel"),
            vmem_limit_bytes=vmem_limit,
        ),
        cost_estimate=cost,
    )(x, w1_t, w2_t, b2_col)

    # (B, G, P) -> (B, G, H, W) is a free NCHW reshape; no slicing needed.
    return out.reshape(B, G, H, W)


def _reference_forward(v_nchw, w1, w2, b2):
    x = jnp.transpose(v_nchw, (0, 2, 3, 1))
    h = jnp.einsum("bhwc,cm->bhwm", x, w1)
    h = jnp.where(h >= 0, h, 0.01 * h)
    y = jnp.einsum("bhwm,mg->bhwg", h, w2) + b2
    return jnp.transpose(y, (0, 3, 1, 2))


if __name__ == "__main__":
    # Module config (small, consistent with the forward pass).
    B, v_features = 2, 4
    mid_features, glimpses = 8, 2

    key = jax.random.PRNGKey(0)
    k_v, k_w1, k_w2, k_b2, k_v2 = jax.random.split(key, 5)

    # Conv2d 1x1 weights as channel matrices.
    w1 = jax.random.normal(k_w1, (v_features, mid_features), dtype=jnp.float32) * 0.1
    w2 = jax.random.normal(k_w2, (mid_features, glimpses), dtype=jnp.float32) * 0.1
    b2 = jax.random.normal(k_b2, (glimpses,), dtype=jnp.float32) * 0.1

    # 16x16 feature map (P = 256, lane-aligned).
    v = jax.random.normal(k_v, (B, v_features, 16, 16), dtype=jnp.float32)
    out = jax.block_until_ready(self_attention_forward(v, w1, w2, b2))
    assert out.shape == (B, glimpses, 16, 16)
    assert jnp.allclose(out, _reference_forward(v, w1, w2, b2), atol=1e-5, rtol=1e-5)

    # 14x14 feature map (P = 196) exercises the pad-free ragged last tile.
    v2 = jax.random.normal(k_v2, (B, v_features, 14, 14), dtype=jnp.float32)
    out2 = jax.block_until_ready(self_attention_forward(v2, w1, w2, b2))
    assert out2.shape == (B, glimpses, 14, 14)
    assert jnp.allclose(out2, _reference_forward(v2, w1, w2, b2), atol=1e-5, rtol=1e-5)

    print("KERNEL_OK")
</pallas_src>

<mosaic_0001>
module attributes {stable_mosaic.version = 11 : i64} {
  func.func @_self_attention_kernel(%arg0: i32, %arg1: i32, %arg2: memref<1x4x256xf32, #tpu.memory_space<vmem>>, %arg3: memref<8x4xf32, #tpu.memory_space<vmem>>, %arg4: memref<2x8xf32, #tpu.memory_space<vmem>>, %arg5: memref<2x1xf32, #tpu.memory_space<vmem>>, %arg6: memref<1x2x256xf32, #tpu.memory_space<vmem>>) attributes {dimension_semantics = [#tpu.dimension_semantics<parallel>, #tpu.dimension_semantics<parallel>], iteration_bounds = array<i64: 1, 2>, scalar_prefetch = 0 : i64, scratch_operands = 0 : i64, tpu.core_type = #tpu.core_type<tc>, window_params = [{transform_indices = @transform_0, window_bounds = array<i64: 1, 4, 256>}, {pipeline_mode = #tpu.pipeline_mode<synchronous>, transform_indices = @transform_1, window_bounds = array<i64: 8, 4>}, {pipeline_mode = #tpu.pipeline_mode<synchronous>, transform_indices = @transform_2, window_bounds = array<i64: 2, 8>}, {pipeline_mode = #tpu.pipeline_mode<synchronous>, transform_indices = @transform_3, window_bounds = array<i64: 2, 1>}, {transform_indices = @transform_4, window_bounds = array<i64: 1, 2, 256>}]} {
    %c0 = arith.constant 0 : index
    %c0_0 = arith.constant 0 : index
    %0 = vector.load %arg3[%c0, %c0_0] : memref<8x4xf32, #tpu.memory_space<vmem>>, vector<8x4xf32>
    %c0_1 = arith.constant 0 : index
    %c0_2 = arith.constant 0 : index
    %c0_3 = arith.constant 0 : index
    %1 = vector.load %arg2[%c0_1, %c0_2, %c0_3] : memref<1x4x256xf32, #tpu.memory_space<vmem>>, vector<1x4x256xf32>
    %2 = vector.shape_cast %1 : vector<1x4x256xf32> to vector<4x256xf32>
    %3 = vector.extract_strided_slice %0 {offsets = [0, 0], sizes = [8, 1], strides = [1, 1]} : vector<8x4xf32> to vector<8x1xf32>
    %4 = vector.extract_strided_slice %2 {offsets = [0, 0], sizes = [1, 256], strides = [1, 1]} : vector<4x256xf32> to vector<1x256xf32>
    %5 = vector.broadcast %3 : vector<8x1xf32> to vector<8x256xf32>
    %6 = vector.broadcast %4 : vector<1x256xf32> to vector<8x256xf32>
    %7 = arith.mulf %5, %6 : vector<8x256xf32>
    %8 = vector.extract_strided_slice %0 {offsets = [0, 1], sizes = [8, 1], strides = [1, 1]} : vector<8x4xf32> to vector<8x1xf32>
    %9 = vector.extract_strided_slice %2 {offsets = [1, 0], sizes = [1, 256], strides = [1, 1]} : vector<4x256xf32> to vector<1x256xf32>
    %10 = vector.broadcast %8 : vector<8x1xf32> to vector<8x256xf32>
    %11 = vector.broadcast %9 : vector<1x256xf32> to vector<8x256xf32>
    %12 = arith.mulf %10, %11 : vector<8x256xf32>
    %13 = arith.addf %7, %12 : vector<8x256xf32>
    %14 = vector.extract_strided_slice %0 {offsets = [0, 2], sizes = [8, 1], strides = [1, 1]} : vector<8x4xf32> to vector<8x1xf32>
    %15 = vector.extract_strided_slice %2 {offsets = [2, 0], sizes = [1, 256], strides = [1, 1]} : vector<4x256xf32> to vector<1x256xf32>
    %16 = vector.broadcast %14 : vector<8x1xf32> to vector<8x256xf32>
    %17 = vector.broadcast %15 : vector<1x256xf32> to vector<8x256xf32>
    %18 = arith.mulf %16, %17 : vector<8x256xf32>
    %19 = arith.addf %13, %18 : vector<8x256xf32>
    %20 = vector.extract_strided_slice %0 {offsets = [0, 3], sizes = [8, 1], strides = [1, 1]} : vector<8x4xf32> to vector<8x1xf32>
    %21 = vector.extract_strided_slice %2 {offsets = [3, 0], sizes = [1, 256], strides = [1, 1]} : vector<4x256xf32> to vector<1x256xf32>
    %22 = vector.broadcast %20 : vector<8x1xf32> to vector<8x256xf32>
    %23 = vector.broadcast %21 : vector<1x256xf32> to vector<8x256xf32>
    %24 = arith.mulf %22, %23 : vector<8x256xf32>
    %25 = arith.addf %19, %24 : vector<8x256xf32>
    %cst = arith.constant 0.000000e+00 : f32
    %26 = vector.broadcast %cst : f32 to vector<8x256xf32>
    %27 = arith.cmpf oge, %25, %26 : vector<8x256xf32>
    %cst_4 = arith.constant 0.00999999977 : f32
    %28 = vector.broadcast %cst_4 : f32 to vector<8x256xf32>
    %29 = arith.mulf %28, %25 : vector<8x256xf32>
    %30 = arith.select %27, %25, %29 : vector<8x256xi1>, vector<8x256xf32>
    %c0_5 = arith.constant 0 : index
    %c0_6 = arith.constant 0 : index
    %31 = vector.load %arg4[%c0_5, %c0_6] : memref<2x8xf32, #tpu.memory_space<vmem>>, vector<2x8xf32>
    %c0_7 = arith.constant 0 : index
    %c0_8 = arith.constant 0 : index
    %32 = vector.load %arg5[%c0_7, %c0_8] : memref<2x1xf32, #tpu.memory_space<vmem>>, vector<2x1xf32>
    %33 = vector.extract_strided_slice %31 {offsets = [0, 0], sizes = [2, 1], strides = [1, 1]} : vector<2x8xf32> to vector<2x1xf32>
    %34 = vector.extract_strided_slice %30 {offsets = [0, 0], sizes = [1, 256], strides = [1, 1]} : vector<8x256xf32> to vector<1x256xf32>
    %35 = vector.broadcast %33 : vector<2x1xf32> to vector<2x256xf32>
    %36 = vector.broadcast %34 : vector<1x256xf32> to vector<2x256xf32>
    %37 = arith.mulf %35, %36 : vector<2x256xf32>
    %38 = vector.extract_strided_slice %31 {offsets = [0, 1], sizes = [2, 1], strides = [1, 1]} : vector<2x8xf32> to vector<2x1xf32>
    %39 = vector.extract_strided_slice %30 {offsets = [1, 0], sizes = [1, 256], strides = [1, 1]} : vector<8x256xf32> to vector<1x256xf32>
    %40 = vector.broadcast %38 : vector<2x1xf32> to vector<2x256xf32>
    %41 = vector.broadcast %39 : vector<1x256xf32> to vector<2x256xf32>
    %42 = arith.mulf %40, %41 : vector<2x256xf32>
    %43 = arith.addf %37, %42 : vector<2x256xf32>
    %44 = vector.extract_strided_slice %31 {offsets = [0, 2], sizes = [2, 1], strides = [1, 1]} : vector<2x8xf32> to vector<2x1xf32>
    %45 = vector.extract_strided_slice %30 {offsets = [2, 0], sizes = [1, 256], strides = [1, 1]} : vector<8x256xf32> to vector<1x256xf32>
    %46 = vector.broadcast %44 : vector<2x1xf32> to vector<2x256xf32>
    %47 = vector.broadcast %45 : vector<1x256xf32> to vector<2x256xf32>
    %48 = arith.mulf %46, %47 : vector<2x256xf32>
    %49 = arith.addf %43, %48 : vector<2x256xf32>
    %50 = vector.extract_strided_slice %31 {offsets = [0, 3], sizes = [2, 1], strides = [1, 1]} : vector<2x8xf32> to vector<2x1xf32>
    %51 = vector.extract_strided_slice %30 {offsets = [3, 0], sizes = [1, 256], strides = [1, 1]} : vector<8x256xf32> to vector<1x256xf32>
    %52 = vector.broadcast %50 : vector<2x1xf32> to vector<2x256xf32>
    %53 = vector.broadcast %51 : vector<1x256xf32> to vector<2x256xf32>
    %54 = arith.mulf %52, %53 : vector<2x256xf32>
    %55 = arith.addf %49, %54 : vector<2x256xf32>
    %56 = vector.extract_strided_slice %31 {offsets = [0, 4], sizes = [2, 1], strides = [1, 1]} : vector<2x8xf32> to vector<2x1xf32>
    %57 = vector.extract_strided_slice %30 {offsets = [4, 0], sizes = [1, 256], strides = [1, 1]} : vector<8x256xf32> to vector<1x256xf32>
    %58 = vector.broadcast %56 : vector<2x1xf32> to vector<2x256xf32>
    %59 = vector.broadcast %57 : vector<1x256xf32> to vector<2x256xf32>
    %60 = arith.mulf %58, %59 : vector<2x256xf32>
    %61 = arith.addf %55, %60 : vector<2x256xf32>
    %62 = vector.extract_strided_slice %31 {offsets = [0, 5], sizes = [2, 1], strides = [1, 1]} : vector<2x8xf32> to vector<2x1xf32>
    %63 = vector.extract_strided_slice %30 {offsets = [5, 0], sizes = [1, 256], strides = [1, 1]} : vector<8x256xf32> to vector<1x256xf32>
    %64 = vector.broadcast %62 : vector<2x1xf32> to vector<2x256xf32>
    %65 = vector.broadcast %63 : vector<1x256xf32> to vector<2x256xf32>
    %66 = arith.mulf %64, %65 : vector<2x256xf32>
    %67 = arith.addf %61, %66 : vector<2x256xf32>
    %68 = vector.extract_strided_slice %31 {offsets = [0, 6], sizes = [2, 1], strides = [1, 1]} : vector<2x8xf32> to vector<2x1xf32>
    %69 = vector.extract_strided_slice %30 {offsets = [6, 0], sizes = [1, 256], strides = [1, 1]} : vector<8x256xf32> to vector<1x256xf32>
    %70 = vector.broadcast %68 : vector<2x1xf32> to vector<2x256xf32>
    %71 = vector.broadcast %69 : vector<1x256xf32> to vector<2x256xf32>
    %72 = arith.mulf %70, %71 : vector<2x256xf32>
    %73 = arith.addf %67, %72 : vector<2x256xf32>
    %74 = vector.extract_strided_slice %31 {offsets = [0, 7], sizes = [2, 1], strides = [1, 1]} : vector<2x8xf32> to vector<2x1xf32>
    %75 = vector.extract_strided_slice %30 {offsets = [7, 0], sizes = [1, 256], strides = [1, 1]} : vector<8x256xf32> to vector<1x256xf32>
    %76 = vector.broadcast %74 : vector<2x1xf32> to vector<2x256xf32>
    %77 = vector.broadcast %75 : vector<1x256xf32> to vector<2x256xf32>
    %78 = arith.mulf %76, %77 : vector<2x256xf32>
    %79 = arith.addf %73, %78 : vector<2x256xf32>
    %80 = vector.broadcast %32 : vector<2x1xf32> to vector<2x256xf32>
    %81 = arith.addf %79, %80 : vector<2x256xf32>
    %c0_9 = arith.constant 0 : index
    %c0_10 = arith.constant 0 : index
    %c0_11 = arith.constant 0 : index
    %82 = vector.load %arg6[%c0_9, %c0_10, %c0_11] : memref<1x2x256xf32, #tpu.memory_space<vmem>>, vector<1x2x256xf32>
    %83 = vector.shape_cast %82 : vector<1x2x256xf32> to vector<2x256xf32>
    %84 = vector.shape_cast %81 : vector<2x256xf32> to vector<1x2x256xf32>
    tpu.vector_store %arg6[%c0_9, %c0_10, %c0_11], %84 {strides = array<i32>} : memref<1x2x256xf32, #tpu.memory_space<vmem>>, vector<1x2x256xf32>,
    return
  }
  func.func @transform_0(%arg0: i32, %arg1: i32) -> (i32, i32, i32) {
    %c0_i32 = arith.constant 0 : i32
    %c0_i32_0 = arith.constant 0 : i32
    return %arg1, %c0_i32, %arg0 : i32, i32, i32
  }
  func.func @transform_1(%arg0: i32, %arg1: i32) -> (i32, i32) {
    %c0_i32 = arith.constant 0 : i32
    %c0_i32_0 = arith.constant 0 : i32
    %c0_i32_1 = arith.constant 0 : i32
    return %c0_i32, %c0_i32_0 : i32, i32
  }
  func.func @transform_2(%arg0: i32, %arg1: i32) -> (i32, i32) {
    %c0_i32 = arith.constant 0 : i32
    %c0_i32_0 = arith.constant 0 : i32
    %c0_i32_1 = arith.constant 0 : i32
    return %c0_i32, %c0_i32_0 : i32, i32
  }
  func.func @transform_3(%arg0: i32, %arg1: i32) -> (i32, i32) {
    %c0_i32 = arith.constant 0 : i32
    %c0_i32_0 = arith.constant 0 : i32
    %c0_i32_1 = arith.constant 0 : i32
    return %c0_i32, %c0_i32_0 : i32, i32
  }
  func.func @transform_4(%arg0: i32, %arg1: i32) -> (i32, i32, i32) {
    %c0_i32 = arith.constant 0 : i32
    %c0_i32_0 = arith.constant 0 : i32
    return %arg1, %c0_i32, %arg0 : i32, i32, i32
  }
}

</mosaic_0001>

<llo_original>
// kernel: self_attention_forward.1
$region0: #{self_attention_forward.1}
  #allocation0 [shape = 'u32[]', space=smem, size = 0x4, offset = 0x4, fixed_abs, tag = 'smem constant byte address 0x4 - core index']
  #allocation1 [shape = 'u32[144,128]{1,0:T(1,128)}', space=vmem, size = 0x12000, scoped, tag = 'internal scratch']
  %s0 = inlined_call_operand.vmem [shape: f32[2,4,256], index: 0, kind: input, shape index: {}]
  %s1 = inlined_call_operand.vmem [shape: f32[8,4], index: 1, kind: input, shape index: {}]
  %s2 = inlined_call_operand.vmem [shape: f32[2,8], index: 2, kind: input, shape index: {}]
  %s3 = inlined_call_operand.vmem [shape: f32[2,1], index: 3, kind: input, shape index: {}]
  %s4 = inlined_call_operand.vmem [shape: f32[2,2,256], index: 4, kind: output, shape index: {}]
  %s5 = sld [smem:[#allocation0]]
  $region49: #{self_attention_forward.1} parent=0
    _
  %s7 = ssub.s32 1, %s5
  %s8 = scalar_select 0, %s7, %s5
  loop: start=0, step=1, limit=4
  $region2: #{self_attention_forward.1} parent=0 // loop_pre_header
    _
  $region3: #{self_attention_forward.1} parent=0 // loop_header
    %s10 = sphi 0, %s14
    %p11 = scmp.ge.s32.totalorder %s10, 4
    %s17 = sphi 0, %s29
    %s18 = sphi 0, %s25
    %s19 = sphi 0, %s17
    %s20 = sphi 0, %s18
    %s21 = sphi 0, %s19
    %s22 = sphi 0, %s20
    %s34 = sphi 0, %s36
    %s37 = sphi 0, %s34
    %s38 = sphi 0, %s37
    %s54 = sphi 0, %s38
    %s58 = sphi 0, %s58
    %s60 = sphi 0, %s58
    %s61 = sphi 0, %s60
    %s75 = sphi 0, %s61
    %s79 = sphi 0, %s79
    %s81 = sphi 0, %s79
    %s82 = sphi 0, %s81
    %s96 = sphi 0, %s82
    %s100 = sphi 0, %s100
    %s102 = sphi 0, %s100
    %s103 = sphi 0, %s102
    %s117 = sphi 0, %s103
    %s125 = sphi 0, %s127
    %s128 = sphi 0, %s125
    %s129 = sphi 0, %s128
    %s145 = sphi 0, %s129
  $region4: #{self_attention_forward.1} parent=0 // loop_header_branch
    %13 = sbr.rel (%p11) target = $region8
  $region5: #{self_attention_forward.1} parent=0 // loop_body
    %s15 = ssub.s32 %s10, 1
    %s16 = ssub.s32 %s10, 2
    %s23 = sadd.s32 1, %s18
    %p24 = scmp.ge.s32.totalorder %s23, 2
    %s25 = scalar_select %p24, 0, %s23
    %s26 = sadd.s32 1, %s17
    %s27 = scalar_select %p24, %s26, %s17
    %p28 = scmp.ge.s32.totalorder %s27, 1
    %s29 = scalar_select %p28, 0, %s27
    %s30 = ssub.s32 %s18, %s25
    %s31 = ssub.s32 %s17, %s29
    %s32 = sor.u32 %s30, %s31
    %p33 = scmp.eq.s32.totalorder %s32, 0
    %s35 = sadd.s32 %s34, 1
    %s36 = scalar_select %p33, %s34, %s35
    %p39 = pneg %p33
    %p40 = scmp.eq.s32.totalorder %s10, 1
    %p41 = por %p39, %p40
    %p42 = scmp.ne.s32.totalorder %s34, %s37
    %p43 = scmp.eq.s32.totalorder %s10, 0
    %p44 = por %p42, %p43
    %p45 = scmp.ne.s32.totalorder %s34, %s37
    %p46 = scmp.eq.s32.totalorder %s15, 1
    %p47 = por %p45, %p46
    %p48 = scmp.ne.s32.totalorder %s37, %s38
    %p49 = scmp.eq.s32.totalorder %s15, 0
    %p50 = por %p48, %p49
    %p51 = scmp.ne.s32.totalorder %s37, %s38
    %p52 = scmp.eq.s32.totalorder %s16, 1
    %p53 = por %p51, %p52
    %p55 = scmp.ne.s32.totalorder %s38, %s54
    %p56 = scmp.eq.s32.totalorder %s16, 0
    %p57 = por %p55, %p56
    %s59 = sadd.s32 %s58, 1
    %p62 = scmp.eq.s32.totalorder %s10, 1
    %p63 = scmp.ne.s32.totalorder %s58, %s60
    %p64 = scmp.eq.s32.totalorder %s10, 0
    %p65 = por %p63, %p64
    %p66 = scmp.ne.s32.totalorder %s58, %s60
    %p67 = scmp.eq.s32.totalorder %s15, 1
    %p68 = por %p66, %p67
    %p69 = scmp.ne.s32.totalorder %s60, %s61
    %p70 = scmp.eq.s32.totalorder %s15, 0
    %p71 = por %p69, %p70
    %p72 = scmp.ne.s32.totalorder %s60, %s61
    %p73 = scmp.eq.s32.totalorder %s16, 1
    %p74 = por %p72, %p73
    %p76 = scmp.ne.s32.totalorder %s61, %s75
    %p77 = scmp.eq.s32.totalorder %s16, 0
    %p78 = por %p76, %p77
    %s80 = sadd.s32 %s79, 1
    %p83 = scmp.eq.s32.totalorder %s10, 1
    %p84 = scmp.ne.s32.totalorder %s79, %s81
    %p85 = scmp.eq.s32.totalorder %s10, 0
    %p86 = por %p84, %p85
    %p87 = scmp.ne.s32.totalorder %s79, %s81
    %p88 = scmp.eq.s32.totalorder %s15, 1
    %p89 = por %p87, %p88
    %p90 = scmp.ne.s32.totalorder %s81, %s82
    %p91 = scmp.eq.s32.totalorder %s15, 0
    %p92 = por %p90, %p91
    %p93 = scmp.ne.s32.totalorder %s81, %s82
    %p94 = scmp.eq.s32.totalorder %s16, 1
    %p95 = por %p93, %p94
    %p97 = scmp.ne.s32.totalorder %s82, %s96
    %p98 = scmp.eq.s32.totalorder %s16, 0
    %p99 = por %p97, %p98
    %s101 = sadd.s32 %s100, 1
    %p104 = scmp.eq.s32.totalorder %s10, 1
    %p105 = scmp.ne.s32.totalorder %s100, %s102
    %p106 = scmp.eq.s32.totalorder %s10, 0
    %p107 = por %p105, %p106
    %p108 = scmp.ne.s32.totalorder %s100, %s102
    %p109 = scmp.eq.s32.totalorder %s15, 1
    %p110 = por %p108, %p109
    %p111 = scmp.ne.s32.totalorder %s102, %s103
    %p112 = scmp.eq.s32.totalorder %s15, 0
    %p113 = por %p111, %p112
    %p114 = scmp.ne.s32.totalorder %s102, %s103
    %p115 = scmp.eq.s32.totalorder %s16, 1
    %p116 = por %p114, %p115
    %p118 = scmp.ne.s32.totalorder %s103, %s117
    %p119 = scmp.eq.s32.totalorder %s16, 0
    %p120 = por %p118, %p119
    %s121 = ssub.s32 %s18, %s25
    %s122 = ssub.s32 %s17, %s29
    %s123 = sor.u32 %s121, %s122
    %p124 = scmp.eq.s32.totalorder %s123, 0
    %s126 = sadd.s32 %s125, 1
    %s127 = scalar_select %p124, %s125, %s126
    %p130 = pneg %p124
    %p131 = scmp.eq.s32.totalorder %s10, 1
    %p132 = por %p130, %p131
    %p133 = scmp.ne.s32.totalorder %s125, %s128
    %p134 = scmp.eq.s32.totalorder %s10, 0
    %p135 = por %p133, %p134
    %p136 = scmp.ne.s32.totalorder %s125, %s128
    %p137 = scmp.eq.s32.totalorder %s15, 1
    %p138 = por %p136, %p137
    %p139 = scmp.ne.s32.totalorder %s128, %s129
    %p140 = scmp.eq.s32.totalorder %s15, 0
    %p141 = por %p139, %p140
    %p142 = scmp.ne.s32.totalorder %s128, %s129
    %p143 = scmp.eq.s32.totalorder %s16, 1
    %p144 = por %p142, %p143
    %p146 = scmp.ne.s32.totalorder %s129, %s145
    %p147 = scmp.eq.s32.totalorder %s16, 0
    %p148 = por %p146, %p147
    %p149 = scmp.le.s32.totalorder 1, %s10
    %p150 = scmp.lt.s32.totalorder %s10, 3
    %p151 = pnand %p149, %p150
    %p152 = pneg %p151
    // Predicated region
    $region9: #{self_attention_forward.1} parent=5 // pred_check
      _
    $region10: #{self_attention_forward.1} parent=5 // pred_check_branch
      %154 = sbr.rel (%p151) target = $region12
    $region11: #{self_attention_forward.1} parent=5 // pred_region
      %s155 = ssub.s32 %s10, 1
      // Predicated region
      $region13: #{self_attention_forward.1} parent=11 // pred_check
        %p156 = pneg %p71
      $region14: #{self_attention_forward.1} parent=11 // pred_check_branch
        %158 = sbr.rel (%p156) target = $region16
      $region15: #{self_attention_forward.1} parent=11 // pred_region
        _
      $region16: #{self_attention_forward.1} parent=11 // pred_fallthru
        _
      // Predicated region
      $region17: #{self_attention_forward.1} parent=11 // pred_check
        %p159 = pneg %p92
      $region18: #{self_attention_forward.1} parent=11 // pred_check_branch
        %161 = sbr.rel (%p159) target = $region20
      $region19: #{self_attention_forward.1} parent=11 // pred_region
        _
      $region20: #{self_attention_forward.1} parent=11 // pred_fallthru
        _
      // Predicated region
      $region21: #{self_attention_forward.1} parent=11 // pred_check
        %p162 = pneg %p113
      $region22: #{self_attention_forward.1} parent=11 // pred_check_branch
        %164 = sbr.rel (%p162) target = $region24
      $region23: #{self_attention_forward.1} parent=11 // pred_region
        _
      $region24: #{self_attention_forward.1} parent=11 // pred_fallthru
        _
    $region12: #{self_attention_forward.1} parent=5 // pred_fallthru
      _
    %p165 = scmp.lt.s32.totalorder %s10, 2
    // Predicated region
    $region25: #{self_attention_forward.1} parent=5 // pred_check
      %p166 = pneg %p165
    $region26: #{self_attention_forward.1} parent=5 // pred_check_branch
      %168 = sbr.rel (%p166) target = $region28
    $region27: #{self_attention_forward.1} parent=5 // pred_region
      // Predicated region
      $region29: #{self_attention_forward.1} parent=27 // pred_check
        %p169 = pneg %p44
      $region30: #{self_attention_forward.1} parent=27 // pred_check_branch
        %171 = sbr.rel (%p169) target = $region32
      $region31: #{self_attention_forward.1} parent=27 // pred_region
        %s172 = smul.u32 2, %s17
        %p173 = scmp.lt.s32.totalorder %s18, 1
        %s174 = scalar_select %p173, %s18, 1
        %p175 = scmp.lt.s32.totalorder %s172, 1
        %s176 = scalar_select %p175, %s172, 1
        %s177 = smul.addr %s174, 2
        %s178 = sadd.s32 %s176, %s177
        %s179 = smul.addr %s178, 4
        %s180 = scalar_lea.vmem %s0, %s179
        %s181 = smul.u32 2, %s17
      $region32: #{self_attention_forward.1} parent=27 // pred_fallthru
        _
    $region28: #{self_attention_forward.1} parent=5 // pred_fallthru
      _
    %p182 = scmp.le.s32.totalorder 1, %s10
    %p183 = scmp.lt.s32.totalorder %s10, 3
    %p184 = pnand %p182, %p183
    %p185 = pneg %p184
    // Predicated region
    $region33: #{self_attention_forward.1} parent=5 // pred_check
      _
    $region34: #{self_attention_forward.1} parent=5 // pred_check_branch
      %187 = sbr.rel (%p184) target = $region36
    $region35: #{self_attention_forward.1} parent=5 // pred_region
      %s188 = ssub.s32 %s10, 1
      %s189 = smul.u32 2, %s19
      %p190 = scmp.lt.s32.totalorder %s20, 1
      %s191 = scalar_select %p190, %s20, 1
      %p192 = scmp.lt.s32.totalorder %s189, 1
      %s193 = scalar_select %p192, %s189, 1
      %s194 = smul.addr %s191, 2
      %s195 = sadd.s32 %s193, %s194
      %s196 = smul.addr %s195, 4
      %s197 = scalar_lea.vmem %s0, %s196
      %p198 = pneg %p50
      %p199 = pneg %p47
      %p200 = pneg %p71
      %p201 = pneg %p68
      %p202 = pneg %p92
      %p203 = pneg %p89
      %p204 = pneg %p113
      %p205 = pneg %p110
      %p206 = pneg %p141
      %p207 = pneg %p138
      %s208 = smul.u32 2, %s19
      %p209 = scmp.lt.s32.totalorder %s20, 1
      %s210 = scalar_select %p209, %s20, 1
      %p211 = scmp.lt.s32.totalorder %s208, 1
      %s212 = scalar_select %p211, %s208, 1
      %s213 = smul.addr %s210, 2
      %s214 = sadd.s32 %s212, %s213
      %s215 = smul.addr %s214, 2
      %s216 = scalar_lea.vmem %s4, %s215
      %s217 = smul.u32 2, %s19
      %p218 = scmp.lt.s32.totalorder %s20, 1
      %s219 = scalar_select %p218, %s20, 1
      %p220 = scmp.lt.s32.totalorder %s217, 1
      %s221 = scalar_select %p220, %s217, 1
      %s222 = smul.addr %s219, 2
      %s223 = sadd.s32 %s221, %s222
      %s224 = smul.addr %s223, 4
      %s225 = scalar_lea.vmem %s0, %s224
      %s226 = smul.u32 2, %s19
      %s227 = smul.u32 2, %s19
      %p228 = scmp.lt.s32.totalorder %s20, 1
      %s229 = scalar_select %p228, %s20, 1
      %p230 = scmp.lt.s32.totalorder %s227, 1
      %s231 = scalar_select %p230, %s227, 1
      %s232 = smul.addr %s229, 2
      %s233 = sadd.s32 %s231, %s232
      %s234 = smul.addr %s233, 2
      %s235 = scalar_lea.vmem %s4, %s234
      %s236 = smul.u32 2, %s19
      %v237 = vld [vmem:[%s1] sm:$0xff]
      %v238 = vld [vmem:[%s225] sm:$0xff]
      %240 = vset.pattern.permute.xlu0 0
      %241 = vperm.xlu0 %240, %v237
      %v242 = vpop.permute.xlu0 %241
      %v245 = vlaneseq
      %v246 = vshrl.u32 %v245, 7
      %v247 = vsub.s32 0, %v246
      %v248 = vrot.slane %v238, %v247
      %v249 = vlaneseq
      %v250 = vshrl.u32 %v249, 7
      %v251 = vsub.s32 4, %v250
      %v252 = vrot.slane %v238, %v251
      %v255 = vlaneseq
      %v256 = vshrl.u32 %v255, 7
      %v257 = vsub.s32 0, %v256
      %v258 = vrot.slane %v248, %v257
      %v259 = vlaneseq
      %v260 = vshrl.u32 %v259, 7
      %v261 = vsub.s32 0, %v260
      %v262 = vrot.slane %v252, %v261
      %v263 = vmul.f32 %v242, %v258
      %v264 = vmul.f32 %v242, %v262
      %265 = vset.pattern.permute.xlu0 1
      %266 = vperm.xlu0 %265, %v237
      %v267 = vpop.permute.xlu0 %266
      %v269 = vlaneseq
      %v270 = vshrl.u32 %v269, 7
      %v271 = vsub.s32 1, %v270
      %v272 = vrot.slane %v238, %v271
      %v273 = vlaneseq
      %v274 = vshrl.u32 %v273, 7
      %v275 = vsub.s32 5, %v274
      %v276 = vrot.slane %v238, %v275
      %v279 = vlaneseq
      %v280 = vshrl.u32 %v279, 7
      %v281 = vsub.s32 1, %v280
      %v282 = vrot.slane %v272, %v281
      %v283 = vlaneseq
      %v284 = vshrl.u32 %v283, 7
      %v285 = vsub.s32 1, %v284
      %v286 = vrot.slane %v276, %v285
      %v287 = vmul.f32 %v267, %v282
      %v288 = vmul.f32 %v267, %v286
      %v289 = vadd.f32 %v263, %v287
      %v290 = vadd.f32 %v264, %v288
      %291 = vset.pattern.permute.xlu0 2
      %292 = vperm.xlu0 %291, %v237
      %v293 = vpop.permute.xlu0 %292
      %v295 = vlaneseq
      %v296 = vshrl.u32 %v295, 7
      %v297 = vsub.s32 2, %v296
      %v298 = vrot.slane %v238, %v297
      %v299 = vlaneseq
      %v300 = vshrl.u32 %v299, 7
      %v301 = vsub.s32 6, %v300
      %v302 = vrot.slane %v238, %v301
      %v305 = vlaneseq
      %v306 = vshrl.u32 %v305, 7
      %v307 = vsub.s32 2, %v306
      %v308 = vrot.slane %v298, %v307
      %v309 = vlaneseq
      %v310 = vshrl.u32 %v309, 7
      %v311 = vsub.s32 2, %v310
      %v312 = vrot.slane %v302, %v311
      %v313 = vmul.f32 %v293, %v308
      %v314 = vmul.f32 %v293, %v312
      %v315 = vadd.f32 %v289, %v313
      %v316 = vadd.f32 %v290, %v314
      %317 = vset.pattern.permute.xlu0 3
      %318 = vperm.xlu0 %317, %v237
      %v319 = vpop.permute.xlu0 %318
      %v321 = vlaneseq
      %v322 = vshrl.u32 %v321, 7
      %v323 = vsub.s32 3, %v322
      %v324 = vrot.slane %v238, %v323
      %v325 = vlaneseq
      %v326 = vshrl.u32 %v325, 7
      %v327 = vsub.s32 7, %v326
      %v328 = vrot.slane %v238, %v327
      %v331 = vlaneseq
      %v332 = vshrl.u32 %v331, 7
      %v333 = vsub.s32 3, %v332
      %v334 = vrot.slane %v324, %v333
      %v335 = vlaneseq
      %v336 = vshrl.u32 %v335, 7
      %v337 = vsub.s32 3, %v336
      %v338 = vrot.slane %v328, %v337
      %v339 = vmul.f32 %v319, %v334
      %v340 = vmul.f32 %v319, %v338
      %v341 = vadd.f32 %v315, %v339
      %v342 = vadd.f32 %v316, %v340
      %vm343 = vcmp.ge.f32.partialorder %v341, 0.0
      %vm344 = vcmp.ge.f32.partialorder %v342, 0.0
      %v345 = vmul.f32 %v341, 0.01
      %v346 = vmul.f32 %v342, 0.01
      %v347 = vsel %vm343, %v341, %v345
      %v348 = vsel %vm344, %v342, %v346
      %v349 = vld [vmem:[%s2] sm:$0x3]
      %v350 = vld [vmem:[%s3] sm:$0x3]
      %352 = vset.pattern.permute.xlu0 0
      %353 = vperm.xlu0 %352, %v349
      %v354 = vpop.permute.xlu0 %353
      %v356 = vlaneseq
      %v357 = vshrl.u32 %v356, 7
      %v358 = vsub.s32 0, %v357
      %v359 = vrot.slane %v347, %v358
      %v360 = vlaneseq
      %v361 = vshrl.u32 %v360, 7
      %v362 = vsub.s32 0, %v361
      %v363 = vrot.slane %v348, %v362
      %v364 = vmul.f32 %v354, %v359
      %v365 = vmul.f32 %v354, %v363
      %366 = vset.pattern.permute.xlu0 1
      %367 = vperm.xlu0 %366, %v349
      %v368 = vpop.permute.xlu0 %367
      %v370 = vlaneseq
      %v371 = vshrl.u32 %v370, 7
      %v372 = vsub.s32 1, %v371
      %v373 = vrot.slane %v347, %v372
      %v374 = vlaneseq
      %v375 = vshrl.u32 %v374, 7
      %v376 = vsub.s32 1, %v375
      %v377 = vrot.slane %v348, %v376
      %v378 = vmul.f32 %v368, %v373
      %v379 = vmul.f32 %v368, %v377
      %v380 = vadd.f32 %v364, %v378
      %v381 = vadd.f32 %v365, %v379
      %382 = vset.pattern.permute.xlu0 2
      %383 = vperm.xlu0 %382, %v349
      %v384 = vpop.permute.xlu0 %383
      %v386 = vlaneseq
      %v387 = vshrl.u32 %v386, 7
      %v388 = vsub.s32 2, %v387
      %v389 = vrot.slane %v347, %v388
      %v390 = vlaneseq
      %v391 = vshrl.u32 %v390, 7
      %v392 = vsub.s32 2, %v391
      %v393 = vrot.slane %v348, %v392
      %v394 = vmul.f32 %v384, %v389
      %v395 = vmul.f32 %v384, %v393
      %v396 = vadd.f32 %v380, %v394
      %v397 = vadd.f32 %v381, %v395
      %398 = vset.pattern.permute.xlu0 3
      %399 = vperm.xlu0 %398, %v349
      %v400 = vpop.permute.xlu0 %399
      %v402 = vlaneseq
      %v403 = vshrl.u32 %v402, 7
      %v404 = vsub.s32 3, %v403
      %v405 = vrot.slane %v347, %v404
      %v406 = vlaneseq
      %v407 = vshrl.u32 %v406, 7
      %v408 = vsub.s32 3, %v407
      %v409 = vrot.slane %v348, %v408
      %v410 = vmul.f32 %v400, %v405
      %v411 = vmul.f32 %v400, %v409
      %v412 = vadd.f32 %v396, %v410
      %v413 = vadd.f32 %v397, %v411
      %414 = vset.pattern.permute.xlu0 4
      %415 = vperm.xlu0 %414, %v349
      %v416 = vpop.permute.xlu0 %415
      %v418 = vlaneseq
      %v419 = vshrl.u32 %v418, 7
      %v420 = vsub.s32 4, %v419
      %v421 = vrot.slane %v347, %v420
      %v422 = vlaneseq
      %v423 = vshrl.u32 %v422, 7
      %v424 = vsub.s32 4, %v423
      %v425 = vrot.slane %v348, %v424
      %v426 = vmul.f32 %v416, %v421
      %v427 = vmul.f32 %v416, %v425
      %v428 = vadd.f32 %v412, %v426
      %v429 = vadd.f32 %v413, %v427
      %430 = vset.pattern.permute.xlu0 5
      %431 = vperm.xlu0 %430, %v349
      %v432 = vpop.permute.xlu0 %431
      %v434 = vlaneseq
      %v435 = vshrl.u32 %v434, 7
      %v436 = vsub.s32 5, %v435
      %v437 = vrot.slane %v347, %v436
      %v438 = vlaneseq
      %v439 = vshrl.u32 %v438, 7
      %v440 = vsub.s32 5, %v439
      %v441 = vrot.slane %v348, %v440
      %v442 = vmul.f32 %v432, %v437
      %v443 = vmul.f32 %v432, %v441
      %v444 = vadd.f32 %v428, %v442
      %v445 = vadd.f32 %v429, %v443
      %446 = vset.pattern.permute.xlu0 6
      %447 = vperm.xlu0 %446, %v349
      %v448 = vpop.permute.xlu0 %447
      %v450 = vlaneseq
      %v451 = vshrl.u32 %v450, 7
      %v452 = vsub.s32 6, %v451
      %v453 = vrot.slane %v347, %v452
      %v454 = vlaneseq
      %v455 = vshrl.u32 %v454, 7
      %v456 = vsub.s32 6, %v455
      %v457 = vrot.slane %v348, %v456
      %v458 = vmul.f32 %v448, %v453
      %v459 = vmul.f32 %v448, %v457
      %v460 = vadd.f32 %v444, %v458
      %v461 = vadd.f32 %v445, %v459
      %462 = vset.pattern.permute.xlu0 7
      %463 = vperm.xlu0 %462, %v349
      %v464 = vpop.permute.xlu0 %463
      %v466 = vlaneseq
      %v467 = vshrl.u32 %v466, 7
      %v468 = vsub.s32 7, %v467
      %v469 = vrot.slane %v347, %v468
      %v470 = vlaneseq
      %v471 = vshrl.u32 %v470, 7
      %v472 = vsub.s32 7, %v471
      %v473 = vrot.slane %v348, %v472
      %v474 = vmul.f32 %v464, %v469
      %v475 = vmul.f32 %v464, %v473
      %v476 = vadd.f32 %v460, %v474
      %v477 = vadd.f32 %v461, %v475
      %479 = vset.pattern.permute.xlu0 0
      %480 = vperm.xlu0 %479, %v350
      %v481 = vpop.permute.xlu0 %480
      %v483 = vadd.f32 %v476, %v481
      %v484 = vadd.f32 %v477, %v481
      %v487 = vcombine.low %v483, %v484
      %v489 = vunpack.c.l.s4 1983009808
      %v490 = vunpack.c.0.s8 %v489
      %v491 = vlaneseq
      %v492 = vshrl.u32 %v491, 7
      %v493 = vsub.s32 %v490, %v492
      %v494 = vrot.slane %v487, %v493
      %496 = vst [vmem:[%s235] sm:$0xf] %v494
      %s497 = smul.u32 2, %s19
      %p498 = scmp.lt.s32.totalorder %s20, 1
      %s499 = scalar_select %p498, %s20, 1
      %p500 = scmp.lt.s32.totalorder %s497, 1
      %s501 = scalar_select %p500, %s497, 1
      %s502 = smul.addr %s499, 2
      %s503 = sadd.s32 %s501, %s502
      %s504 = smul.addr %s503, 2
      %s505 = scalar_lea.vmem %s4, %s504
      // Predicated region
      $region37: #{self_attention_forward.1} parent=35 // pred_check
        %p506 = pneg %p138
      $region38: #{self_attention_forward.1} parent=35 // pred_check_branch
        %508 = sbr.rel (%p506) target = $region40
      $region39: #{self_attention_forward.1} parent=35 // pred_region
        %s509 = smul.u32 2, %s19
      $region40: #{self_attention_forward.1} parent=35 // pred_fallthru
        _
    $region36: #{self_attention_forward.1} parent=5 // pred_fallthru
      _
    %p510 = scmp.le.s32.totalorder 2, %s10
    // Predicated region
    $region41: #{self_attention_forward.1} parent=5 // pred_check
      %p511 = pneg %p510
    $region42: #{self_attention_forward.1} parent=5 // pred_check_branch
      %513 = sbr.rel (%p511) target = $region44
    $region43: #{self_attention_forward.1} parent=5 // pred_region
      %s514 = ssub.s32 %s10, 2
      // Predicated region
      $region45: #{self_attention_forward.1} parent=43 // pred_check
        %p515 = pneg %p144
      $region46: #{self_attention_forward.1} parent=43 // pred_check_branch
        %517 = sbr.rel (%p515) target = $region48
      $region47: #{self_attention_forward.1} parent=43 // pred_region
        %s518 = smul.u32 2, %s21
        %p519 = scmp.lt.s32.totalorder %s22, 1
        %s520 = scalar_select %p519, %s22, 1
        %p521 = scmp.lt.s32.totalorder %s518, 1
        %s522 = scalar_select %p521, %s518, 1
        %s523 = smul.addr %s520, 2
        %s524 = sadd.s32 %s522, %s523
        %s525 = smul.addr %s524, 2
        %s526 = scalar_lea.vmem %s4, %s525
      $region48: #{self_attention_forward.1} parent=43 // pred_fallthru
        _
    $region44: #{self_attention_forward.1} parent=5 // pred_fallthru
      _
  $region6: #{self_attention_forward.1} parent=0 // loop_footer
    %s14 = sadd.s32 1, %s10
  $region7: #{self_attention_forward.1} parent=0 // loop_footer_branch
    %9 = sbr.rel target = $region3
  $region8: #{self_attention_forward.1} parent=0 // loop_exit
    _

</llo_original>
